<compile_context>
chip_gen: v6e
topology: v6e:2x2x1
jax: 0.10.0
libtpu: 0.0.40
codegen_flags: <defaults>
</compile_context>

<pallas_src>
import jax
import jax.numpy as jnp
from jax.experimental import pallas as pl
from jax.experimental.pallas import tpu as pltpu


def linear_kernel(x_ref, w_ref, b_ref, o_ref):
    # x_ref: (TB, IN), w_ref: (IN, OUT) — already transposed in wrapper,
    # b_ref: (1, OUT), o_ref: (TB, OUT)
    y = jnp.dot(x_ref[...], w_ref[...], preferred_element_type=jnp.float32)
    o_ref[...] = (y + b_ref[...]).astype(o_ref.dtype)


def dummy_model_forward(x, weight, bias, tb_max=1024):
    """x: (B, 10) f32; weight: (5, 10) f32 (PyTorch layout); bias: (5,) f32.

    Returns x @ weight.T + bias, shape (B, 5).
    """
    B, IN = x.shape
    OUT = weight.shape[0]

    # One-time wrapper-side transpose: kernel consumes (IN, OUT).
    w_t = weight.T
    b2d = bias.reshape(1, OUT)

    # Batch tile size: either the whole (small) batch, or a multiple-of-8 tile.
    if B <= tb_max:
        TB = B                      # full-dim block: always layout-legal
    else:
        TB = tb_max                 # multiple of 8

    # Pad B so TB divides it (last tile must be full-sized).
    B_pad = pl.cdiv(B, TB) * TB
    if B_pad != B:
        x = jnp.pad(x, ((0, B_pad - B), (0, 0)))

    grid = (B_pad // TB,)

    cost = pl.CostEstimate(
        flops=2 * B_pad * IN * OUT,
        transcendentals=0,
        bytes_accessed=4 * (B_pad * IN + IN * OUT + OUT + B_pad * OUT),
    )

    y = pl.pallas_call(
        linear_kernel,
        out_shape=jax.ShapeDtypeStruct((B_pad, OUT), jnp.float32),
        grid=grid,
        in_specs=[
            pl.BlockSpec((TB, IN), lambda i: (i, 0)),    # x: tiled over batch
            pl.BlockSpec((IN, OUT), lambda i: (0, 0)),   # weight: VMEM-resident
            pl.BlockSpec((1, OUT), lambda i: (0, 0)),    # bias: VMEM-resident
        ],
        out_specs=pl.BlockSpec((TB, OUT), lambda i: (i, 0)),
        compiler_params=pltpu.CompilerParams(
            dimension_semantics=("parallel",),           # v7x: shard batch across TCs
        ),
        cost_estimate=cost,
    )(x, w_t, b2d)

    return y[:B] if B_pad != B else y


if __name__ == "__main__":
    key = jax.random.PRNGKey(0)
    kx, kw, kb = jax.random.split(key, 3)

    B, IN, OUT = 2, 10, 5
    # Deterministic parameter init (mimics nn.Linear's uniform(-1/sqrt(in), 1/sqrt(in)))
    bound = 1.0 / (IN ** 0.5)
    weight = jax.random.uniform(kw, (OUT, IN), jnp.float32, -bound, bound)
    bias = jax.random.uniform(kb, (OUT,), jnp.float32, -bound, bound)
    x = jax.random.normal(kx, (B, IN), jnp.float32)

    y = dummy_model_forward(x, weight, bias)
    y = jax.block_until_ready(y)

    # Cross-check against plain JAX reference (PyTorch semantics: x @ W.T + b)
    y_ref = x @ weight.T + bias
    assert y.shape == (B, OUT)
    assert jnp.allclose(y, y_ref, atol=1e-5), "mismatch vs reference"
    print("KERNEL_OK")
</pallas_src>

<mosaic_0001>
module attributes {stable_mosaic.version = 11 : i64} {
  func.func @linear_kernel(%arg0: i32, %arg1: memref<2x10xf32, #tpu.memory_space<vmem>>, %arg2: memref<10x5xf32, #tpu.memory_space<vmem>>, %arg3: memref<1x5xf32, #tpu.memory_space<vmem>>, %arg4: memref<2x5xf32, #tpu.memory_space<vmem>>) attributes {dimension_semantics = [#tpu.dimension_semantics<parallel>], iteration_bounds = array<i64: 1>, scalar_prefetch = 0 : i64, scratch_operands = 0 : i64, tpu.core_type = #tpu.core_type<tc>, window_params = [{transform_indices = @transform_0, window_bounds = array<i64: 2, 10>}, {pipeline_mode = #tpu.pipeline_mode<synchronous>, transform_indices = @transform_1, window_bounds = array<i64: 10, 5>}, {pipeline_mode = #tpu.pipeline_mode<synchronous>, transform_indices = @transform_2, window_bounds = array<i64: 1, 5>}, {transform_indices = @transform_3, window_bounds = array<i64: 2, 5>}]} {
    %c0 = arith.constant 0 : index
    %c0_0 = arith.constant 0 : index
    %0 = vector.load %arg1[%c0, %c0_0] : memref<2x10xf32, #tpu.memory_space<vmem>>, vector<2x10xf32>
    %c0_1 = arith.constant 0 : index
    %c0_2 = arith.constant 0 : index
    %1 = vector.load %arg2[%c0_1, %c0_2] : memref<10x5xf32, #tpu.memory_space<vmem>>, vector<10x5xf32>
    %cst = arith.constant dense<0.000000e+00> : vector<2x5xf32>
    %2 = tpu.matmul %0, %1, %cst {dimension_numbers = #tpu.dot_dimension_numbers<[1], [0], [0], [1], [0, 0, 1, 1], [], []>} : vector<2x10xf32>, vector<10x5xf32>, vector<2x5xf32> -> vector<2x5xf32>
    %c0_3 = arith.constant 0 : index
    %c0_4 = arith.constant 0 : index
    %3 = vector.load %arg3[%c0_3, %c0_4] : memref<1x5xf32, #tpu.memory_space<vmem>>, vector<1x5xf32>
    %4 = vector.broadcast %3 : vector<1x5xf32> to vector<2x5xf32>
    %5 = arith.addf %2, %4 : vector<2x5xf32>
    %c0_5 = arith.constant 0 : index
    %c0_6 = arith.constant 0 : index
    %6 = vector.load %arg4[%c0_5, %c0_6] : memref<2x5xf32, #tpu.memory_space<vmem>>, vector<2x5xf32>
    tpu.vector_store %arg4[%c0_5, %c0_6], %5 {strides = array<i32>} : memref<2x5xf32, #tpu.memory_space<vmem>>, vector<2x5xf32>,
    return
  }
  func.func @transform_0(%arg0: i32) -> (i32, i32) {
    %c0_i32 = arith.constant 0 : i32
    %c0_i32_0 = arith.constant 0 : i32
    return %arg0, %c0_i32 : i32, i32
  }
  func.func @transform_1(%arg0: i32) -> (i32, i32) {
    %c0_i32 = arith.constant 0 : i32
    %c0_i32_0 = arith.constant 0 : i32
    %c0_i32_1 = arith.constant 0 : i32
    return %c0_i32, %c0_i32_0 : i32, i32
  }
  func.func @transform_2(%arg0: i32) -> (i32, i32) {
    %c0_i32 = arith.constant 0 : i32
    %c0_i32_0 = arith.constant 0 : i32
    %c0_i32_1 = arith.constant 0 : i32
    return %c0_i32, %c0_i32_0 : i32, i32
  }
  func.func @transform_3(%arg0: i32) -> (i32, i32) {
    %c0_i32 = arith.constant 0 : i32
    %c0_i32_0 = arith.constant 0 : i32
    return %arg0, %c0_i32 : i32, i32
  }
}

</mosaic_0001>

<llo_original>
// kernel: tpu_custom_call.1
$region0: #{tpu_custom_call.1}
  #allocation0 [shape = 'u32[]', space=smem, size = 0x4, offset = 0x4, fixed_abs, tag = 'smem constant byte address 0x4 - core index']
  #allocation1 [shape = 'u32[144,128]{1,0:T(1,128)}', space=vmem, size = 0x12000, scoped, tag = 'internal scratch']
  %s0 = inlined_call_operand.vmem [shape: f32[2,10], index: 0, kind: input, shape index: {}]
  %s1 = inlined_call_operand.vmem [shape: f32[10,5], index: 1, kind: input, shape index: {}]
  %s2 = inlined_call_operand.vmem [shape: f32[1,5], index: 2, kind: input, shape index: {}]
  %s3 = inlined_call_operand.hbm [shape: f32[2,5], index: 3, kind: output, shape index: {}]
  %s4 = sld [smem:[#allocation0]]
  $region22: #{tpu_custom_call.1} parent=0
    _
  %s6 = ssub.s32 1, %s4
  %s7 = scalar_select 0, %s6, %s4
  $region1: #{tpu_custom_call.1} parent=0
    #allocation2 [shape = 'u8[1024]{0}', space=vmem, size = 0x400, scoped, tag = 'output window, operand 0, single buffered']
    #allocation3 [shape = 's32[1]{0}', space=sflag, size = 0x4, scoped, tag = 'scoped memory for tpu_custom_call.1']
    %8 = vsyncpa [#allocation3], 0
    // Predicated region
    $region2: #{tpu_custom_call.1} parent=1 // pred_check
      _
    $region3: #{tpu_custom_call.1} parent=1 // pred_check_branch
      %10 = sbr.rel (0) target = $region5
    $region4: #{tpu_custom_call.1} parent=1 // pred_region
      _
    $region5: #{tpu_custom_call.1} parent=1 // pred_fallthru
      _
    // Predicated region
    $region6: #{tpu_custom_call.1} parent=1 // pred_check
      _
    $region7: #{tpu_custom_call.1} parent=1 // pred_check_branch
      %12 = sbr.rel (0) target = $region9
    $region8: #{tpu_custom_call.1} parent=1 // pred_region
      _
    $region9: #{tpu_custom_call.1} parent=1 // pred_fallthru
      _
    // Predicated region
    $region10: #{tpu_custom_call.1} parent=1 // pred_check
      _
    $region11: #{tpu_custom_call.1} parent=1 // pred_check_branch
      %14 = sbr.rel (0) target = $region13
    $region12: #{tpu_custom_call.1} parent=1 // pred_region
      _
    $region13: #{tpu_custom_call.1} parent=1 // pred_fallthru
      _
    %v15 = vld [vmem:[%s0] sm:$0x3]
    %v16 = vld [vmem:[%s1] sm:$0xff]
    %v17 = vld [vmem:[%s1 + $0x8] sm:$0x3]
    %v18 = vld [vmem:[%s2] sm:$0x1]
    %v20 = vlaneseq
    %v21 = vshrl.u32 %v20, 7
    %v22 = vsub.s32 0, %v21
    %v23 = vrot.slane %v18, %v22
    %vm25 = vcmask 80896
    %v27 = vsel %vm25, %v15, 0
    %vm29 = vcmask 1041408
    %v31 = vsel %vm29, %v17, 0
    %33 = vmatprep.subr.mxu0 0.0
    %34 = vmatpush1.msra.mxu0 0.0
    %35 = vmatprep.subr.mxu0 0.0
    %36 = vmatpush1.msra.mxu0 0.0
    %37 = vmatprep.subr.mxu0 0.0
    %38 = vmatpush1.msra.mxu0 0.0
    %39 = vmatprep.subr.mxu0 0.0
    %40 = vmatpush1.msra.mxu0 0.0
    %41 = vmatprep.subr.mxu0 0.0
    %42 = vmatpush1.msra.mxu0 0.0
    %43 = vmatprep.subr.mxu0 0.0
    %44 = vmatpush1.msra.mxu0 0.0
    %45 = vmatprep.subr.mxu0 0.0
    %46 = vmatpush1.msra.mxu0 0.0
    %47 = vmatprep.subr.mxu0 0.0
    %48 = vmatpush1.msra.mxu0 0.0
    %49 = vmatprep.subr.mxu0 0.0
    %50 = vmatpush1.msra.mxu0 0.0
    %51 = vmatprep.subr.mxu0 0.0
    %52 = vmatpush1.msra.mxu0 0.0
    %53 = vmatprep.subr.mxu0 0.0
    %54 = vmatpush1.msra.mxu0 0.0
    %55 = vmatprep.subr.mxu0 0.0
    %56 = vmatpush1.msra.mxu0 0.0
    %57 = vmatprep.subr.mxu0 0.0
    %58 = vmatpush1.msra.mxu0 0.0
    %59 = vmatprep.subr.mxu0 0.0
    %60 = vmatpush1.msra.mxu0 0.0
    %61 = vmatprep.subr.mxu0 0.0
    %62 = vmatpush1.msra.mxu0 %v31
    %63 = vmatprep.subr.mxu0 0.0
    %64 = vmatpush1.msra.mxu0 %v16
    %65 = vmatprep.subr.mxu0 0.0
    %66 = vmatpush2.msra.mxu0 0.0
    %67 = vmatprep.subr.mxu0 0.0
    %68 = vmatpush2.msra.mxu0 0.0
    %69 = vmatprep.subr.mxu0 0.0
    %70 = vmatpush2.msra.mxu0 0.0
    %71 = vmatprep.subr.mxu0 0.0
    %72 = vmatpush2.msra.mxu0 0.0
    %73 = vmatprep.subr.mxu0 0.0
    %74 = vmatpush2.msra.mxu0 0.0
    %75 = vmatprep.subr.mxu0 0.0
    %76 = vmatpush2.msra.mxu0 0.0
    %77 = vmatprep.subr.mxu0 0.0
    %78 = vmatpush2.msra.mxu0 0.0
    %79 = vmatprep.subr.mxu0 0.0
    %80 = vmatpush2.msra.mxu0 0.0
    %81 = vmatprep.subr.mxu0 0.0
    %82 = vmatpush2.msra.mxu0 0.0
    %83 = vmatprep.subr.mxu0 0.0
    %84 = vmatpush2.msra.mxu0 0.0
    %85 = vmatprep.subr.mxu0 0.0
    %86 = vmatpush2.msra.mxu0 0.0
    %87 = vmatprep.subr.mxu0 0.0
    %88 = vmatpush2.msra.mxu0 0.0
    %89 = vmatprep.subr.mxu0 0.0
    %90 = vmatpush2.msra.mxu0 0.0
    %91 = vmatprep.subr.mxu0 0.0
    %92 = vmatpush2.msra.mxu0 0.0
    %93 = vmatprep.subr.mxu0 0.0
    %94 = vmatpush2.msra.mxu0 0.0
    %95 = vmatprep.subr.mxu0 0.0
    %96 = vmatpush2.msra.mxu0 0.0
    %97 = vmatprep.mubr.f32.mxu0 0.0
    %98 = vmatmul.mubr.f32.gmra.mxu0 %v27
    %v99 = vpop.f32.mrf.mxu0
    %v100 = vadd.f32 %v23, %v99
    %v101 = vpop.f32.mrf.mxu0
    %102 = vdwg.mxu0
    %vm103 = vcmask 33792
    %104 = vst.msk [vmem:[#allocation2] sm:$0x3] %vm103, %v100
    // Predicated region
    $region14: #{tpu_custom_call.1} parent=1 // pred_check
      _
    $region15: #{tpu_custom_call.1} parent=1 // pred_check_branch
      %106 = sbr.rel (0) target = $region17
    $region16: #{tpu_custom_call.1} parent=1 // pred_region
      %s108 = ssub.s32 32, 32
      %109 = vsyncadd [#allocation3], %s108
      %s111 = sshll.u32 [#allocation2], 4
      %s112 = int_to_ptr.vmem [resolvable:$true] %s111
      %114 = dma.vmem_to_hbm [thread:$0]  %s112, 32, %s3, [#allocation3]
    $region17: #{tpu_custom_call.1} parent=1 // pred_fallthru
      _
    // Predicated region
    $region18: #{tpu_custom_call.1} parent=1 // pred_check
      _
    $region19: #{tpu_custom_call.1} parent=1 // pred_check_branch
      %116 = sbr.rel (0) target = $region21
    $region20: #{tpu_custom_call.1} parent=1 // pred_region
      %117 = dma.done [#allocation3], 32
    $region21: #{tpu_custom_call.1} parent=1 // pred_fallthru
      _
    %118 = vsyncpa [#allocation3], 1

</llo_original>
